<compile_context>
chip_gen: v5e
topology: v5e:2x2
jax: 0.10.0
libtpu: 0.0.40
codegen_flags: <defaults>
</compile_context>

<pallas_src>
import jax
import jax.numpy as jnp
from jax.experimental import pallas as pl
from jax.experimental.pallas import tpu as pltpu


def _round_up(x, m):
    return (x + m - 1) // m * m


def _step_vmem_bytes(tm, tn, D_pad):
    """Double-buffered per-step working set of the fused kernel."""
    return 2 * (tm * D_pad * 4       # X tile (f32, cast to bf16 in-kernel)
                + D_pad * tn * 2     # W tile (bf16)
                + tn * 4             # bias row (f32)
                + tm * 2 * 4         # (phone_id, sign) per frame (int32)
                + tm * tn * 2        # logits out (bf16)
                + 16 * tn * 4)       # merged bce-sum / mask-count stats (f32)


def _choose_tiles(M, D_pad, C_pad, *, target_tm=1024, vmem_budget=24 << 20):
    """Pick (tm, tn).  tm targets 1024 rows (BW-bound kernel: bigger tiles
    amortise the ~0.35us per-step pipeline overhead) but is shrunk to respect a
    conservative VMEM budget that is safe on v7x (64 MiB physical) and v5e.
    tn follows the MXU width: 256 when class_num allows it (v6e/v7x MXUs are
    256 wide; tn=128 already saturates v5e's 128x128 MXU)."""
    tn = 256 if (C_pad >= 256 and C_pad % 256 == 0) else 128
    n_blocks = max(1, pl.cdiv(M, target_tm))
    tm = _round_up(pl.cdiv(M, n_blocks), 32)
    while tm > 32 and _step_vmem_bytes(tm, tn, D_pad) > vmem_budget:
        n_blocks += 1
        tm = _round_up(pl.cdiv(M, n_blocks), 32)
    # TODO(synk): for very large upstream_dim (layer-concat ~10k) even tm=32 may
    # not fit; a K grid axis with an f32 accumulator scratch would be needed.
    return tm, tn


# ----------------------------------------------------------------------------
# Fused kernel: logits = X @ W + b ; masked-BCE partial sums/counts
# ----------------------------------------------------------------------------
def _fused_linear_bce_kernel(x_ref, w_ref, b_ref, lab_ref, o_ref, stat_ref):
    # Single-shot MXU matmul over the whole (padded) feature dim.  X is cast to
    # bf16 here (VPU cast, cheap) so the HBM stream stays a single f32 read.
    x = x_ref[...].astype(jnp.bfloat16)
    logits = jnp.dot(x, w_ref[...], preferred_element_type=jnp.float32)
    logits = logits + b_ref[...]                         # (tm, tn) f32
    o_ref[...] = logits.astype(o_ref.dtype)              # thin bf16 write-back

    tm, tn = logits.shape
    j = pl.program_id(1)

    # Rebuild the one-non-zero-per-frame {-1,0,+1} label tile from compact
    # per-frame (phone_id, sign) pairs.
    col = jax.lax.broadcasted_iota(jnp.int32, (tm, tn), 1) + j * tn
    pid = lab_ref[:, 0:1]                                 # (tm, 1) int32
    sgn = lab_ref[:, 1:2].astype(jnp.float32)             # (tm, 1) in {-1,0,+1}
    mask = jnp.where(jnp.logical_and(col == pid, sgn != 0.0), 1.0, 0.0)
    tgt = (sgn + 1.0) * 0.5                               # (labels+1)/2, row bcast

    # Numerically stable BCE-with-logits: max(x,0) - x*t + log1p(exp(-|x|)).
    # (f32 elementwise / EUP math; DMA-bound kernel so the dense softplus is
    # not the binding slot -- see review note; could be reduced to one column
    # per frame if a bundle profile ever shows EUP binding on v5e.)
    bce = (jnp.maximum(logits, 0.0) - logits * tgt
           + jnp.log1p(jnp.exp(-jnp.abs(logits))))

    # Partial sums as sublane-strided (tm//8, 8, tn) VPU adds -> (8, tn); both
    # halves live in one (16, tn) output block (single small output DMA).
    stat_ref[0:8, :] = jnp.sum((bce * mask).reshape(tm // 8, 8, tn), axis=0)
    stat_ref[8:16, :] = jnp.sum(mask.reshape(tm // 8, 8, tn), axis=0)


def fused_linear_bce(x_f32, w_bf16, b_f32, frame_lab_i32, *, tm, tn):
    """x_f32: (M_pad, D_pad) f32; w_bf16: (D_pad, C_pad) bf16;
    b_f32: (C_pad,) f32; frame_lab_i32: (M_pad, 2) int32 = (phone_id, sign).
    Returns (loss_scalar f32, logits (M_pad, C_pad) bf16)."""
    M_pad, D_pad = x_f32.shape
    _, C_pad = w_bf16.shape
    n_i = M_pad // tm
    n_j = C_pad // tn
    b2 = b_f32.reshape(1, C_pad).astype(jnp.float32)

    needed = _step_vmem_bytes(tm, tn, D_pad)
    vmem_limit = int(min(max(2 * needed, 32 << 20), 48 << 20))

    logits, stats = pl.pallas_call(
        _fused_linear_bce_kernel,
        out_shape=(
            jax.ShapeDtypeStruct((M_pad, C_pad), jnp.bfloat16),
            jax.ShapeDtypeStruct((n_i * 16, C_pad), jnp.float32),
        ),
        grid_spec=pltpu.PrefetchScalarGridSpec(
            num_scalar_prefetch=0,
            grid=(n_i, n_j),
            in_specs=[
                pl.BlockSpec((tm, D_pad), lambda i, j: (i, 0)),   # X tile (f32)
                pl.BlockSpec((D_pad, tn), lambda i, j: (0, j)),   # W tile (bf16)
                pl.BlockSpec((1, tn), lambda i, j: (0, j)),       # bias row
                pl.BlockSpec((tm, 2), lambda i, j: (i, 0)),       # (pid, sign)
            ],
            out_specs=(
                pl.BlockSpec((tm, tn), lambda i, j: (i, j)),      # logits (bf16)
                pl.BlockSpec((16, tn), lambda i, j: (i, j)),      # bce / count
            ),
        ),
        compiler_params=pltpu.CompilerParams(
            dimension_semantics=("parallel", "parallel"),
            vmem_limit_bytes=vmem_limit),
    )(x_f32, w_bf16, b2, frame_lab_i32)

    stats = stats.reshape(n_i, 16, C_pad)
    loss = jnp.sum(stats[:, :8]) / jnp.maximum(jnp.sum(stats[:, 8:]), 1.0)
    return loss, logits


# ----------------------------------------------------------------------------
# DownstreamExpert equivalent (synthetic parameters, forward only)
# ----------------------------------------------------------------------------
class DownstreamExpertPallas:
    def __init__(self, upstream_dim, class_num, key):
        # self.model = Linear(upstream_dim, class_num)  (deterministic init)
        kw, kb = jax.random.split(key)
        scale = 1.0 / jnp.sqrt(jnp.float32(upstream_dim))
        self.W = jax.random.uniform(kw, (upstream_dim, class_num),
                                    jnp.float32, -scale, scale)
        self.b = jax.random.uniform(kb, (class_num,), jnp.float32, -scale, scale)
        self.upstream_dim = upstream_dim
        self.class_num = class_num
        # Parameters are static: pad / cast them once, not per forward.
        self.D_pad = _round_up(upstream_dim, 128)
        self.C_pad = _round_up(class_num, 128)
        self.W_dev = jnp.pad(
            self.W, ((0, self.D_pad - upstream_dim),
                     (0, self.C_pad - class_num))).astype(jnp.bfloat16)
        self.b_dev = jnp.pad(self.b, (0, self.C_pad - class_num)).astype(jnp.float32)
        # TODO(synk): phone_weights / class_weight / npc / summarise options of
        # `criterion` are disabled in the default config and not implemented here.

    def _pad_inputs(self, features_list, phone_ids_list, signs_list):
        # process_input_forward: pad to max length with zeros (padding frames
        # get sign 0 -> excluded from the masked BCE mean).
        T = max(f.shape[0] for f in features_list)
        feats = jnp.stack([
            jnp.pad(f, ((0, T - f.shape[0]), (0, 0))) for f in features_list])
        pids = jnp.stack([
            jnp.pad(p, (0, T - p.shape[0])) for p in phone_ids_list])
        sgns = jnp.stack([
            jnp.pad(s, (0, T - s.shape[0])) for s in signs_list])
        return feats, pids, sgns

    def forward(self, features_list, phone_ids_list, signs_list):
        """features: list of (T_i, upstream_dim) f32.
        phone_ids / signs: per-frame compact labels -- the frame-wise label
        matrix of the original module is sign at column phone_id, 0 elsewhere."""
        feats, pids, sgns = self._pad_inputs(features_list, phone_ids_list, signs_list)
        B, T, D = feats.shape
        C = self.class_num
        M = B * T

        tm, tn = _choose_tiles(M, self.D_pad, self.C_pad)
        M_pad = _round_up(M, tm)

        # X stays f32 (cast to bf16 inside the kernel); pad only if needed.
        x2d = feats.reshape(M, D)
        if (M_pad != M) or (self.D_pad != D):
            x2d = jnp.pad(x2d, ((0, M_pad - M), (0, self.D_pad - D)))

        # Compact per-frame labels: column 0 = phone_id, column 1 = sign.
        lab = jnp.stack([pids.reshape(M), sgns.reshape(M)], axis=1).astype(jnp.int32)
        if M_pad != M:
            lab = jnp.pad(lab, ((0, M_pad - M), (0, 0)))   # pads -> sign 0 -> masked

        loss, logits = fused_linear_bce(x2d, self.W_dev, self.b_dev, lab,
                                        tm=tm, tn=tn)
        # Slice only when padding was actually added (avoids relayout copies;
        # C_pad == class_num whenever class_num is a multiple of 128).
        if M_pad != M:
            logits = logits[:M]
        if self.C_pad != C:
            logits = logits[:, :C]
        logits = logits.reshape(B, T, C)
        return loss, logits


# ----------------------------------------------------------------------------
# Pure-JAX reference for correctness (same bf16 matmul / f32 accumulation)
# ----------------------------------------------------------------------------
def ref_forward(feats2d, labels2d, W, b):
    logits = jnp.dot(feats2d.astype(jnp.bfloat16), W.astype(jnp.bfloat16),
                     preferred_element_type=jnp.float32) + b
    tgt = (labels2d + 1.0) / 2.0
    mask = labels2d != 0.0
    bce = (jnp.maximum(logits, 0.0) - logits * tgt
           + jnp.log1p(jnp.exp(-jnp.abs(logits))))
    loss = jnp.sum(jnp.where(mask, bce, 0.0)) / jnp.maximum(jnp.sum(mask), 1)
    return loss, logits


if __name__ == "__main__":
    B, T, D, C = 2, 64, 256, 128          # batch, frames, upstream_dim, class_num
    lengths = [50, 64]                     # variable-length utterances

    key = jax.random.PRNGKey(0)
    kf, kp, ks, km = jax.random.split(key, 4)

    # synthetic upstream features and per-frame (phone_id, sign) labels;
    # sign: +1 correct, -1 mispronounced, 0 unscored
    feats_full = jax.random.normal(kf, (B, T, D), jnp.float32)
    phone_ids_full = jax.random.randint(kp, (B, T), 1, C)
    u = jax.random.uniform(ks, (B, T))
    signs_full = jnp.where(u < 0.6, 1, jnp.where(u < 0.9, -1, 0)).astype(jnp.int32)

    features_list = [feats_full[i, :lengths[i]] for i in range(B)]
    phone_ids_list = [phone_ids_full[i, :lengths[i]] for i in range(B)]
    signs_list = [signs_full[i, :lengths[i]] for i in range(B)]

    expert = DownstreamExpertPallas(D, C, km)
    loss, logits = expert.forward(features_list, phone_ids_list, signs_list)
    loss = jax.block_until_ready(loss)

    # ---- reference check against the dense-label formulation ----------------
    T_max = max(lengths)
    M = B * T_max
    feats_pad, pids_pad, sgns_pad = expert._pad_inputs(
        features_list, phone_ids_list, signs_list)
    labels_dense = (jax.nn.one_hot(pids_pad.reshape(M), C, dtype=jnp.float32)
                    * sgns_pad.reshape(M, 1).astype(jnp.float32))
    loss_ref, logits_ref = ref_forward(feats_pad.reshape(M, D), labels_dense,
                                       expert.W, expert.b)

    assert jnp.allclose(loss, loss_ref, rtol=2e-3, atol=2e-3), (loss, loss_ref)
    # kernel logits are stored as bf16 (thin write-back); compare loosely
    assert jnp.allclose(logits.reshape(M, C).astype(jnp.float32), logits_ref,
                        rtol=3e-2, atol=3e-2)

    print("KERNEL_OK")
</pallas_src>

<mosaic_0001>
module attributes {stable_mosaic.version = 11 : i64} {
  func.func @_fused_linear_bce_kernel(%arg0: i32, %arg1: i32, %arg2: memref<128x256xf32, #tpu.memory_space<vmem>>, %arg3: memref<256x128xbf16, #tpu.memory_space<vmem>>, %arg4: memref<1x128xf32, #tpu.memory_space<vmem>>, %arg5: memref<128x2xi32, #tpu.memory_space<vmem>>, %arg6: memref<128x128xbf16, #tpu.memory_space<vmem>>, %arg7: memref<16x128xf32, #tpu.memory_space<vmem>>) attributes {dimension_semantics = [#tpu.dimension_semantics<parallel>, #tpu.dimension_semantics<parallel>], iteration_bounds = array<i64: 1, 1>, scalar_prefetch = 0 : i64, scratch_operands = 0 : i64, tpu.core_type = #tpu.core_type<tc>, window_params = [{transform_indices = @transform_0, window_bounds = array<i64: 128, 256>}, {transform_indices = @transform_1, window_bounds = array<i64: 256, 128>}, {transform_indices = @transform_2, window_bounds = array<i64: 1, 128>}, {transform_indices = @transform_3, window_bounds = array<i64: 128, 2>}, {transform_indices = @transform_4, window_bounds = array<i64: 128, 128>}, {transform_indices = @transform_5, window_bounds = array<i64: 16, 128>}]} {
    %c0 = arith.constant 0 : index
    %c0_0 = arith.constant 0 : index
    %0 = vector.load %arg2[%c0, %c0_0] : memref<128x256xf32, #tpu.memory_space<vmem>>, vector<128x256xf32>
    %1 = arith.truncf %0 : vector<128x256xf32> to vector<128x256xbf16>
    %c0_1 = arith.constant 0 : index
    %c0_2 = arith.constant 0 : index
    %2 = vector.load %arg3[%c0_1, %c0_2] : memref<256x128xbf16, #tpu.memory_space<vmem>>, vector<256x128xbf16>
    %cst = arith.constant dense<0.000000e+00> : vector<128x128xf32>
    %3 = tpu.matmul %1, %2, %cst {dimension_numbers = #tpu.dot_dimension_numbers<[1], [0], [0], [1], [0, 0, 1, 1], [], []>} : vector<128x256xbf16>, vector<256x128xbf16>, vector<128x128xf32> -> vector<128x128xf32>
    %c0_3 = arith.constant 0 : index
    %c0_4 = arith.constant 0 : index
    %4 = vector.load %arg4[%c0_3, %c0_4] : memref<1x128xf32, #tpu.memory_space<vmem>>, vector<1x128xf32>
    %5 = vector.broadcast %4 : vector<1x128xf32> to vector<128x128xf32>
    %6 = arith.addf %3, %5 : vector<128x128xf32>
    %7 = arith.truncf %6 : vector<128x128xf32> to vector<128x128xbf16>
    %c0_5 = arith.constant 0 : index
    %c0_6 = arith.constant 0 : index
    %8 = vector.load %arg6[%c0_5, %c0_6] : memref<128x128xbf16, #tpu.memory_space<vmem>>, vector<128x128xbf16>
    tpu.vector_store %arg6[%c0_5, %c0_6], %7 {strides = array<i32>} : memref<128x128xbf16, #tpu.memory_space<vmem>>, vector<128x128xbf16>,
    %9 = tpu.iota {dimensions = array<i32: 1>} : vector<128x128xi32>
    %c128_i32 = arith.constant 128 : i32
    %10 = arith.muli %arg1, %c128_i32 : i32
    %11 = vector.broadcast %10 : i32 to vector<128x128xi32>
    %12 = arith.addi %9, %11 : vector<128x128xi32>
    %c0_7 = arith.constant 0 : index
    %c0_8 = arith.constant 0 : index
    %13 = vector.load %arg5[%c0_7, %c0_8] : memref<128x2xi32, #tpu.memory_space<vmem>>, vector<128x1xi32>
    %c0_9 = arith.constant 0 : index
    %c1 = arith.constant 1 : index
    %14 = vector.load %arg5[%c0_9, %c1] : memref<128x2xi32, #tpu.memory_space<vmem>>, vector<128x1xi32>
    %15 = arith.sitofp %14 : vector<128x1xi32> to vector<128x1xf32>
    %16 = vector.broadcast %13 : vector<128x1xi32> to vector<128x128xi32>
    %17 = arith.cmpi eq, %12, %16 : vector<128x128xi32>
    %cst_10 = arith.constant 0.000000e+00 : f32
    %18 = vector.broadcast %cst_10 : f32 to vector<128x1xf32>
    %19 = arith.cmpf one, %15, %18 : vector<128x1xf32>
    %20 = vector.broadcast %19 : vector<128x1xi1> to vector<128x128xi1>
    %21 = arith.andi %17, %20 : vector<128x128xi1>
    %cst_11 = arith.constant 1.000000e+00 : f32
    %cst_12 = arith.constant 0.000000e+00 : f32
    %22 = vector.broadcast %cst_11 : f32 to vector<128x128xf32>
    %23 = vector.broadcast %cst_12 : f32 to vector<128x128xf32>
    %24 = arith.select %21, %22, %23 : vector<128x128xi1>, vector<128x128xf32>
    %cst_13 = arith.constant 1.000000e+00 : f32
    %25 = vector.broadcast %cst_13 : f32 to vector<128x1xf32>
    %26 = arith.addf %15, %25 : vector<128x1xf32>
    %cst_14 = arith.constant 5.000000e-01 : f32
    %27 = vector.broadcast %cst_14 : f32 to vector<128x1xf32>
    %28 = arith.mulf %26, %27 : vector<128x1xf32>
    %cst_15 = arith.constant 0.000000e+00 : f32
    %29 = vector.broadcast %cst_15 : f32 to vector<128x128xf32>
    %30 = arith.maximumf %6, %29 : vector<128x128xf32>
    %31 = vector.broadcast %28 : vector<128x1xf32> to vector<128x128xf32>
    %32 = arith.mulf %6, %31 : vector<128x128xf32>
    %33 = arith.subf %30, %32 : vector<128x128xf32>
    %34 = math.absf %6 : vector<128x128xf32>
    %cst_16 = arith.constant 0.000000e+00 : f32
    %35 = vector.broadcast %cst_16 : f32 to vector<128x128xf32>
    %36 = arith.subf %35, %34 : vector<128x128xf32>
    %37 = math.exp %36 : vector<128x128xf32>
    %38 = math.log1p %37 : vector<128x128xf32>
    %39 = arith.addf %33, %38 : vector<128x128xf32>
    %40 = arith.mulf %39, %24 : vector<128x128xf32>
    %41 = vector.shape_cast %40 : vector<128x128xf32> to vector<16x8x128xf32>
    %cst_17 = arith.constant dense<0.000000e+00> : vector<8x128xf32>
    %42 = vector.multi_reduction <add>, %41, %cst_17 [0] : vector<16x8x128xf32> to vector<8x128xf32>
    %c0_18 = arith.constant 0 : index
    %c0_19 = arith.constant 0 : index
    %43 = vector.load %arg7[%c0_18, %c0_19] : memref<16x128xf32, #tpu.memory_space<vmem>>, vector<8x128xf32>
    tpu.vector_store %arg7[%c0_18, %c0_19], %42 {strides = array<i32>} : memref<16x128xf32, #tpu.memory_space<vmem>>, vector<8x128xf32>,
    %44 = vector.shape_cast %24 : vector<128x128xf32> to vector<16x8x128xf32>
    %cst_20 = arith.constant dense<0.000000e+00> : vector<8x128xf32>
    %45 = vector.multi_reduction <add>, %44, %cst_20 [0] : vector<16x8x128xf32> to vector<8x128xf32>
    %c8 = arith.constant 8 : index
    %c0_21 = arith.constant 0 : index
    %46 = vector.load %arg7[%c8, %c0_21] : memref<16x128xf32, #tpu.memory_space<vmem>>, vector<8x128xf32>
    tpu.vector_store %arg7[%c8, %c0_21], %45 {strides = array<i32>} : memref<16x128xf32, #tpu.memory_space<vmem>>, vector<8x128xf32>,
    return
  }
  func.func @transform_0(%arg0: i32, %arg1: i32) -> (i32, i32) {
    %c0_i32 = arith.constant 0 : i32
    %c0_i32_0 = arith.constant 0 : i32
    return %arg0, %c0_i32 : i32, i32
  }
  func.func @transform_1(%arg0: i32, %arg1: i32) -> (i32, i32) {
    %c0_i32 = arith.constant 0 : i32
    %c0_i32_0 = arith.constant 0 : i32
    return %c0_i32, %arg1 : i32, i32
  }
  func.func @transform_2(%arg0: i32, %arg1: i32) -> (i32, i32) {
    %c0_i32 = arith.constant 0 : i32
    %c0_i32_0 = arith.constant 0 : i32
    return %c0_i32, %arg1 : i32, i32
  }
  func.func @transform_3(%arg0: i32, %arg1: i32) -> (i32, i32) {
    %c0_i32 = arith.constant 0 : i32
    %c0_i32_0 = arith.constant 0 : i32
    return %arg0, %c0_i32 : i32, i32
  }
  func.func @transform_4(%arg0: i32, %arg1: i32) -> (i32, i32) {
    %c0_i32 = arith.constant 0 : i32
    return %arg0, %arg1 : i32, i32
  }
  func.func @transform_5(%arg0: i32, %arg1: i32) -> (i32, i32) {
    %c0_i32 = arith.constant 0 : i32
    return %arg0, %arg1 : i32, i32
  }
}

</mosaic_0001>

<llo_original>
// kernel: tpu_custom_call.1
$region0: #{tpu_custom_call.1}
  #allocation0 [shape = 'u32[]', space=smem, size = 0x4, offset = 0x4, fixed_abs, tag = 'smem constant byte address 0x4 - core index']
  #allocation1 [shape = 'u32[72,128]{1,0:T(1,128)}', space=vmem, size = 0x9000, scoped, tag = 'internal scratch']
  %s0 = inlined_call_operand.hbm [shape: f32[128,256], index: 0, kind: input, shape index: {}]
  %s1 = inlined_call_operand.vmem [shape: bf16[256,128], index: 1, kind: input, shape index: {}]
  %s2 = inlined_call_operand.vmem [shape: f32[1,128], index: 2, kind: input, shape index: {}]
  %s3 = inlined_call_operand.vmem [shape: s32[128,2], index: 3, kind: input, shape index: {}]
  %s4 = inlined_call_operand.hbm [shape: bf16[128,128], index: 4, kind: output, shape index: {0}]
  %s5 = inlined_call_operand.hbm [shape: f32[16,128], index: 5, kind: output, shape index: {1}]
  %6 = xla_tuple %s4, %s5
  %s7 = sld [smem:[#allocation0]]
  $region38: #{tpu_custom_call.1} parent=0
    _
  %s9 = ssub.s32 1, %s7
  %s10 = scalar_select 0, %s9, %s7
  $region1: #{tpu_custom_call.1} parent=0
    #allocation2 [shape = 'u8[131072]{0}', space=vmem, size = 0x20000, scoped, tag = 'input window, operand 0, single buffered']
    #allocation3 [shape = 's32[1]{0}', space=sflag, size = 0x4, scoped, tag = 'scoped memory for tpu_custom_call.1']
    #allocation4 [shape = 's32[1]{0}', space=sflag, size = 0x4, scoped, tag = 'scoped memory for tpu_custom_call.1']
    #allocation5 [shape = 'u8[32768]{0}', space=vmem, size = 0x8000, scoped, tag = 'output window, operand 0, single buffered']
    #allocation6 [shape = 'u8[8192]{0}', space=vmem, size = 0x2000, scoped, tag = 'output window, operand 1, single buffered']
    #allocation7 [shape = 's32[1]{0}', space=sflag, size = 0x4, scoped, tag = 'scoped memory for tpu_custom_call.1']
    %11 = vsyncpa [#allocation3], 0
    %12 = vsyncpa [#allocation4], 0
    %13 = vsyncpa [#allocation7], 0
    // Predicated region
    $region2: #{tpu_custom_call.1} parent=1 // pred_check
      _
    $region3: #{tpu_custom_call.1} parent=1 // pred_check_branch
      %15 = sbr.rel (0) target = $region5
    $region4: #{tpu_custom_call.1} parent=1 // pred_region
      %17 = vsyncadd [#allocation3], 0
      %s18 = sshll.u32 %s0, 4
      %s19 = int_to_ptr.hbm [resolvable:$true] %s18
      %s20 = sshll.u32 [#allocation2], 4
      %s21 = int_to_ptr.vmem [resolvable:$true] %s20
      %26 = dma.hbm_to_vmem [thread:$0]  %s19, 4096, %s21, [#allocation3], 256, 256, 16
    $region5: #{tpu_custom_call.1} parent=1 // pred_fallthru
      _
    // Predicated region
    $region6: #{tpu_custom_call.1} parent=1 // pred_check
      _
    $region7: #{tpu_custom_call.1} parent=1 // pred_check_branch
      %28 = sbr.rel (0) target = $region9
    $region8: #{tpu_custom_call.1} parent=1 // pred_region
      _
    $region9: #{tpu_custom_call.1} parent=1 // pred_fallthru
      _
    // Predicated region
    $region10: #{tpu_custom_call.1} parent=1 // pred_check
      _
    $region11: #{tpu_custom_call.1} parent=1 // pred_check_branch
      %30 = sbr.rel (0) target = $region13
    $region12: #{tpu_custom_call.1} parent=1 // pred_region
      _
    $region13: #{tpu_custom_call.1} parent=1 // pred_fallthru
      _
    // Predicated region
    $region14: #{tpu_custom_call.1} parent=1 // pred_check
      _
    $region15: #{tpu_custom_call.1} parent=1 // pred_check_branch
      %32 = sbr.rel (0) target = $region17
    $region16: #{tpu_custom_call.1} parent=1 // pred_region
      _
    $region17: #{tpu_custom_call.1} parent=1 // pred_fallthru
      _
    // Predicated region
    $region18: #{tpu_custom_call.1} parent=1 // pred_check
      _
    $region19: #{tpu_custom_call.1} parent=1 // pred_check_branch
      %34 = sbr.rel (0) target = $region21
    $region20: #{tpu_custom_call.1} parent=1 // pred_region
      %36 = dma.done [#allocation3], 4096
    $region21: #{tpu_custom_call.1} parent=1 // pred_fallthru
      _
    %v37 = vld [vmem:[#allocation2] sm:$0xff]
    %v38 = vld [vmem:[#allocation2 + $0x8] sm:$0xff]
    %v39 = vld [vmem:[#allocation2 + $0x10] sm:$0xff]
    %v40 = vld [vmem:[#allocation2 + $0x18] sm:$0xff]
    %v41 = vld [vmem:[#allocation2 + $0x20] sm:$0xff]
    %v42 = vld [vmem:[#allocation2 + $0x28] sm:$0xff]
    %v43 = vld [vmem:[#allocation2 + $0x30] sm:$0xff]
    %v44 = vld [vmem:[#allocation2 + $0x38] sm:$0xff]
    %v45 = vld [vmem:[#allocation2 + $0x40] sm:$0xff]
    %v46 = vld [vmem:[#allocation2 + $0x48] sm:$0xff]
    %v47 = vld [vmem:[#allocation2 + $0x50] sm:$0xff]
    %v48 = vld [vmem:[#allocation2 + $0x58] sm:$0xff]
    %v49 = vld [vmem:[#allocation2 + $0x60] sm:$0xff]
    %v50 = vld [vmem:[#allocation2 + $0x68] sm:$0xff]
    %v51 = vld [vmem:[#allocation2 + $0x70] sm:$0xff]
    %v52 = vld [vmem:[#allocation2 + $0x78] sm:$0xff]
    %v53 = vld [vmem:[#allocation2 + $0x80] sm:$0xff]
    %v54 = vld [vmem:[#allocation2 + $0x88] sm:$0xff]
    %v55 = vld [vmem:[#allocation2 + $0x90] sm:$0xff]
    %v56 = vld [vmem:[#allocation2 + $0x98] sm:$0xff]
    %v57 = vld [vmem:[#allocation2 + $0xa0] sm:$0xff]
    %v58 = vld [vmem:[#allocation2 + $0xa8] sm:$0xff]
    %v59 = vld [vmem:[#allocation2 + $0xb0] sm:$0xff]
    %v60 = vld [vmem:[#allocation2 + $0xb8] sm:$0xff]
    %v61 = vld [vmem:[#allocation2 + $0xc0] sm:$0xff]
    %v62 = vld [vmem:[#allocation2 + $0xc8] sm:$0xff]
    %v63 = vld [vmem:[#allocation2 + $0xd0] sm:$0xff]
    %v64 = vld [vmem:[#allocation2 + $0xd8] sm:$0xff]
    %v65 = vld [vmem:[#allocation2 + $0xe0] sm:$0xff]
    %v66 = vld [vmem:[#allocation2 + $0xe8] sm:$0xff]
    %v67 = vld [vmem:[#allocation2 + $0xf0] sm:$0xff]
    %v68 = vld [vmem:[#allocation2 + $0xf8] sm:$0xff]
    %v69 = vpack.c.bf16 %v39, %v37
    %v70 = vpack.c.bf16 %v40, %v38
    %v71 = vpack.c.bf16 %v43, %v41
    %v72 = vpack.c.bf16 %v44, %v42
    %v73 = vpack.c.bf16 %v47, %v45
    %v74 = vpack.c.bf16 %v48, %v46
    %v75 = vpack.c.bf16 %v51, %v49
    %v76 = vpack.c.bf16 %v52, %v50
    %v77 = vpack.c.bf16 %v55, %v53
    %v78 = vpack.c.bf16 %v56, %v54
    %v79 = vpack.c.bf16 %v59, %v57
    %v80 = vpack.c.bf16 %v60, %v58
    %v81 = vpack.c.bf16 %v63, %v61
    %v82 = vpack.c.bf16 %v64, %v62
    %v83 = vpack.c.bf16 %v67, %v65
    %v84 = vpack.c.bf16 %v68, %v66
    %v85 = vld [vmem:[%s1] sm:$0xf]
    %v86 = vld [vmem:[%s1 + $0x4] sm:$0xf]
    %v87 = vld [vmem:[%s1 + $0x8] sm:$0xf]
    %v88 = vld [vmem:[%s1 + $0xc] sm:$0xf]
    %v89 = vld [vmem:[%s1 + $0x10] sm:$0xf]
    %v90 = vld [vmem:[%s1 + $0x14] sm:$0xf]
    %v91 = vld [vmem:[%s1 + $0x18] sm:$0xf]
    %v92 = vld [vmem:[%s1 + $0x1c] sm:$0xf]
    %v93 = vld [vmem:[%s1 + $0x20] sm:$0xf]
    %v94 = vld [vmem:[%s1 + $0x24] sm:$0xf]
    %v95 = vld [vmem:[%s1 + $0x28] sm:$0xf]
    %v96 = vld [vmem:[%s1 + $0x2c] sm:$0xf]
    %v97 = vld [vmem:[%s1 + $0x30] sm:$0xf]
    %v98 = vld [vmem:[%s1 + $0x34] sm:$0xf]
    %v99 = vld [vmem:[%s1 + $0x38] sm:$0xf]
    %v100 = vld [vmem:[%s1 + $0x3c] sm:$0xf]
    %v101 = vld [vmem:[%s1 + $0x40] sm:$0xf]
    %v102 = vld [vmem:[%s1 + $0x44] sm:$0xf]
    %v103 = vld [vmem:[%s1 + $0x48] sm:$0xf]
    %v104 = vld [vmem:[%s1 + $0x4c] sm:$0xf]
    %v105 = vld [vmem:[%s1 + $0x50] sm:$0xf]
    %v106 = vld [vmem:[%s1 + $0x54] sm:$0xf]
    %v107 = vld [vmem:[%s1 + $0x58] sm:$0xf]
    %v108 = vld [vmem:[%s1 + $0x5c] sm:$0xf]
    %v109 = vld [vmem:[%s1 + $0x60] sm:$0xf]
    %v110 = vld [vmem:[%s1 + $0x64] sm:$0xf]
    %v111 = vld [vmem:[%s1 + $0x68] sm:$0xf]
    %v112 = vld [vmem:[%s1 + $0x6c] sm:$0xf]
    %v113 = vld [vmem:[%s1 + $0x70] sm:$0xf]
    %v114 = vld [vmem:[%s1 + $0x74] sm:$0xf]
    %v115 = vld [vmem:[%s1 + $0x78] sm:$0xf]
    %v116 = vld [vmem:[%s1 + $0x7c] sm:$0xf]
    %v117 = vld [vmem:[%s2] sm:$0x1]
    %v119 = vperm.slane %v117, 0
    %v153 = vunpack.c.l.b16 %v85
    %v154 = vunpack.c.l.b16 %v86
    %v155 = vunpack.c.l.b16 %v87
    %v156 = vunpack.c.l.b16 %v88
    %v157 = vunpack.c.l.b16 %v89
    %v158 = vunpack.c.l.b16 %v90
    %v159 = vunpack.c.l.b16 %v91
    %v160 = vunpack.c.l.b16 %v92
    %v161 = vunpack.c.l.b16 %v93
    %v162 = vunpack.c.l.b16 %v94
    %v163 = vunpack.c.l.b16 %v95
    %v164 = vunpack.c.l.b16 %v96
    %v165 = vunpack.c.l.b16 %v97
    %v166 = vunpack.c.l.b16 %v98
    %v167 = vunpack.c.l.b16 %v99
    %v168 = vunpack.c.l.b16 %v100
    %v169 = vunpack.c.l.b16 %v101
    %v170 = vunpack.c.l.b16 %v102
    %v171 = vunpack.c.l.b16 %v103
    %v172 = vunpack.c.l.b16 %v104
    %v173 = vunpack.c.l.b16 %v105
    %v174 = vunpack.c.l.b16 %v106
    %v175 = vunpack.c.l.b16 %v107
    %v176 = vunpack.c.l.b16 %v108
    %v177 = vunpack.c.l.b16 %v109
    %v178 = vunpack.c.l.b16 %v110
    %v179 = vunpack.c.l.b16 %v111
    %v180 = vunpack.c.l.b16 %v112
    %v181 = vunpack.c.l.b16 %v113
    %v182 = vunpack.c.l.b16 %v114
    %v183 = vunpack.c.l.b16 %v115
    %v184 = vunpack.c.l.b16 %v116
    %v185 = vpack.c.b16 %v154, %v153
    %v186 = vpack.c.b16 %v156, %v155
    %v187 = vpack.c.b16 %v158, %v157
    %v188 = vpack.c.b16 %v160, %v159
    %v189 = vpack.c.b16 %v162, %v161
    %v190 = vpack.c.b16 %v164, %v163
    %v191 = vpack.c.b16 %v166, %v165
    %v192 = vpack.c.b16 %v168, %v167
    %v193 = vpack.c.b16 %v170, %v169
    %v194 = vpack.c.b16 %v172, %v171
    %v195 = vpack.c.b16 %v174, %v173
    %v196 = vpack.c.b16 %v176, %v175
    %v197 = vpack.c.b16 %v178, %v177
    %v198 = vpack.c.b16 %v180, %v179
    %v199 = vpack.c.b16 %v182, %v181
    %v200 = vpack.c.b16 %v184, %v183
    %217 = vmatpush.bf16.msra.mxu0 %v192
    %218 = vmatpush.bf16.msra.mxu0 %v191
    %219 = vmatpush.bf16.msra.mxu0 %v190
    %220 = vmatpush.bf16.msra.mxu0 %v189
    %221 = vmatpush.bf16.msra.mxu0 %v188
    %222 = vmatpush.bf16.msra.mxu0 %v187
    %223 = vmatpush.bf16.msra.mxu0 %v186
    %224 = vmatpush.bf16.msra.mxu0 %v185
    %225 = vmatmul.bf16.gmra.mxu0 %v69
    %v226 = vpop.f32.mrf.mxu0
    %v227 = vadd.f32 %v119, %v226
    %v228 = vpop.f32.mrf.mxu0
    %v229 = vadd.f32 %v119, %v228
    %230 = vmatmul.bf16.gmra.mxu0 %v71
    %v231 = vpop.f32.mrf.mxu0
    %v232 = vadd.f32 %v119, %v231
    %v233 = vpop.f32.mrf.mxu0
    %v234 = vadd.f32 %v119, %v233
    %235 = vmatmul.bf16.gmra.mxu0 %v73
    %v236 = vpop.f32.mrf.mxu0
    %v237 = vadd.f32 %v119, %v236
    %v238 = vpop.f32.mrf.mxu0
    %v239 = vadd.f32 %v119, %v238
    %240 = vmatmul.bf16.gmra.mxu0 %v75
    %v241 = vpop.f32.mrf.mxu0
    %v242 = vadd.f32 %v119, %v241
    %v243 = vpop.f32.mrf.mxu0
    %v244 = vadd.f32 %v119, %v243
    %245 = vmatmul.bf16.gmra.mxu0 %v77
    %v246 = vpop.f32.mrf.mxu0
    %v247 = vadd.f32 %v119, %v246
    %v248 = vpop.f32.mrf.mxu0
    %v249 = vadd.f32 %v119, %v248
    %250 = vmatmul.bf16.gmra.mxu0 %v79
    %v251 = vpop.f32.mrf.mxu0
    %v252 = vadd.f32 %v119, %v251
    %v253 = vpop.f32.mrf.mxu0
    %v254 = vadd.f32 %v119, %v253
    %255 = vmatmul.bf16.gmra.mxu0 %v81
    %v256 = vpop.f32.mrf.mxu0
    %v257 = vadd.f32 %v119, %v256
    %v258 = vpop.f32.mrf.mxu0
    %v259 = vadd.f32 %v119, %v258
    %260 = vmatmul.bf16.gmra.mxu0 %v83
    %v261 = vpop.f32.mrf.mxu0
    %v262 = vadd.f32 %v119, %v261
    %v263 = vpop.f32.mrf.mxu0
    %v264 = vadd.f32 %v119, %v263
    %265 = vdwg.mxu0
    %266 = vmatpush.bf16.msra.mxu0 %v200
    %267 = vmatpush.bf16.msra.mxu0 %v199
    %268 = vmatpush.bf16.msra.mxu0 %v198
    %269 = vmatpush.bf16.msra.mxu0 %v197
    %270 = vmatpush.bf16.msra.mxu0 %v196
    %271 = vmatpush.bf16.msra.mxu0 %v195
    %272 = vmatpush.bf16.msra.mxu0 %v194
    %273 = vmatpush.bf16.msra.mxu0 %v193
    %274 = vmatmul.bf16.gmra.mxu0 %v70
    %v275 = vpop.f32.mrf.mxu0
    %v276 = vadd.f32 %v227, %v275
    %v277 = vpop.f32.mrf.mxu0
    %v278 = vadd.f32 %v229, %v277
    %279 = vmatmul.bf16.gmra.mxu0 %v72
    %v280 = vpop.f32.mrf.mxu0
    %v281 = vadd.f32 %v232, %v280
    %v282 = vpop.f32.mrf.mxu0
    %v283 = vadd.f32 %v234, %v282
    %284 = vmatmul.bf16.gmra.mxu0 %v74
    %v285 = vpop.f32.mrf.mxu0
    %v286 = vadd.f32 %v237, %v285
    %v287 = vpop.f32.mrf.mxu0
    %v288 = vadd.f32 %v239, %v287
    %289 = vmatmul.bf16.gmra.mxu0 %v76
    %v290 = vpop.f32.mrf.mxu0
    %v291 = vadd.f32 %v242, %v290
    %v292 = vpop.f32.mrf.mxu0
    %v293 = vadd.f32 %v244, %v292
    %294 = vmatmul.bf16.gmra.mxu0 %v78
    %v295 = vpop.f32.mrf.mxu0
    %v296 = vadd.f32 %v247, %v295
    %v297 = vpop.f32.mrf.mxu0
    %v298 = vadd.f32 %v249, %v297
    %299 = vmatmul.bf16.gmra.mxu0 %v80
    %v300 = vpop.f32.mrf.mxu0
    %v301 = vadd.f32 %v252, %v300
    %v302 = vpop.f32.mrf.mxu0
    %v303 = vadd.f32 %v254, %v302
    %304 = vmatmul.bf16.gmra.mxu0 %v82
    %v305 = vpop.f32.mrf.mxu0
    %v306 = vadd.f32 %v257, %v305
    %v307 = vpop.f32.mrf.mxu0
    %v308 = vadd.f32 %v259, %v307
    %309 = vmatmul.bf16.gmra.mxu0 %v84
    %v310 = vpop.f32.mrf.mxu0
    %v311 = vadd.f32 %v262, %v310
    %v312 = vpop.f32.mrf.mxu0
    %v313 = vadd.f32 %v264, %v312
    %314 = vdwg.mxu0
    %v315 = vpack.c.bf16 %v276, %v276
    %v316 = vpack.c.bf16 %v278, %v278
    %v317 = vpack.c.bf16 %v281, %v281
    %v318 = vpack.c.bf16 %v283, %v283
    %v319 = vpack.c.bf16 %v286, %v286
    %v320 = vpack.c.bf16 %v288, %v288
    %v321 = vpack.c.bf16 %v291, %v291
    %v322 = vpack.c.bf16 %v293, %v293
    %v323 = vpack.c.bf16 %v296, %v296
    %v324 = vpack.c.bf16 %v298, %v298
    %v325 = vpack.c.bf16 %v301, %v301
    %v326 = vpack.c.bf16 %v303, %v303
    %v327 = vpack.c.bf16 %v306, %v306
    %v328 = vpack.c.bf16 %v308, %v308
    %v329 = vpack.c.bf16 %v311, %v311
    %v330 = vpack.c.bf16 %v313, %v313
    %331 = vst [vmem:[#allocation5] sm:$0xf] %v315
    %332 = vst [vmem:[#allocation5 + $0x4] sm:$0xf] %v316
    %333 = vst [vmem:[#allocation5 + $0x8] sm:$0xf] %v317
    %334 = vst [vmem:[#allocation5 + $0xc] sm:$0xf] %v318
    %335 = vst [vmem:[#allocation5 + $0x10] sm:$0xf] %v319
    %336 = vst [vmem:[#allocation5 + $0x14] sm:$0xf] %v320
    %337 = vst [vmem:[#allocation5 + $0x18] sm:$0xf] %v321
    %338 = vst [vmem:[#allocation5 + $0x1c] sm:$0xf] %v322
    %339 = vst [vmem:[#allocation5 + $0x20] sm:$0xf] %v323
    %340 = vst [vmem:[#allocation5 + $0x24] sm:$0xf] %v324
    %341 = vst [vmem:[#allocation5 + $0x28] sm:$0xf] %v325
    %342 = vst [vmem:[#allocation5 + $0x2c] sm:$0xf] %v326
    %343 = vst [vmem:[#allocation5 + $0x30] sm:$0xf] %v327
    %344 = vst [vmem:[#allocation5 + $0x34] sm:$0xf] %v328
    %345 = vst [vmem:[#allocation5 + $0x38] sm:$0xf] %v329
    %346 = vst [vmem:[#allocation5 + $0x3c] sm:$0xf] %v330
    %v347 = vlaneseq
    %v348 = vand.u32 %v347, 127
    %s349 = smul.u32 0, 128
    %v350 = vstv %s349
    %v351 = vadd.s32 %v348, %v350
    %v352 = vld [vmem:[%s3] sm:$0xff]
    %v353 = vld [vmem:[%s3 + $0x8] sm:$0xff]
    %v354 = vld [vmem:[%s3 + $0x10] sm:$0xff]
    %v355 = vld [vmem:[%s3 + $0x18] sm:$0xff]
    %v356 = vld [vmem:[%s3 + $0x20] sm:$0xff]
    %v357 = vld [vmem:[%s3 + $0x28] sm:$0xff]
    %v358 = vld [vmem:[%s3 + $0x30] sm:$0xff]
    %v359 = vld [vmem:[%s3 + $0x38] sm:$0xff]
    %v360 = vld [vmem:[%s3 + $0x40] sm:$0xff]
    %v361 = vld [vmem:[%s3 + $0x48] sm:$0xff]
    %v362 = vld [vmem:[%s3 + $0x50] sm:$0xff]
    %v363 = vld [vmem:[%s3 + $0x58] sm:$0xff]
    %v364 = vld [vmem:[%s3 + $0x60] sm:$0xff]
    %v365 = vld [vmem:[%s3 + $0x68] sm:$0xff]
    %v366 = vld [vmem:[%s3 + $0x70] sm:$0xff]
    %v367 = vld [vmem:[%s3 + $0x78] sm:$0xff]
    %v368 = vcvt.s32.f32 %v352
    %v369 = vcvt.s32.f32 %v353
    %v370 = vcvt.s32.f32 %v354
    %v371 = vcvt.s32.f32 %v355
    %v372 = vcvt.s32.f32 %v356
    %v373 = vcvt.s32.f32 %v357
    %v374 = vcvt.s32.f32 %v358
    %v375 = vcvt.s32.f32 %v359
    %v376 = vcvt.s32.f32 %v360
    %v377 = vcvt.s32.f32 %v361
    %v378 = vcvt.s32.f32 %v362
    %v379 = vcvt.s32.f32 %v363
    %v380 = vcvt.s32.f32 %v364
    %v381 = vcvt.s32.f32 %v365
    %v382 = vcvt.s32.f32 %v366
    %v383 = vcvt.s32.f32 %v367
    %384 = vset.pattern.permute.xlu0 0
    %385 = vperm.xlu0 %384, %v352
    %v386 = vpop.permute.xlu0 %385
    %387 = vset.pattern.permute.xlu0 0
    %388 = vperm.xlu0 %387, %v353
    %v389 = vpop.permute.xlu0 %388
    %390 = vset.pattern.permute.xlu0 0
    %391 = vperm.xlu0 %390, %v354
    %v392 = vpop.permute.xlu0 %391
    %393 = vset.pattern.permute.xlu0 0
    %394 = vperm.xlu0 %393, %v355
    %v395 = vpop.permute.xlu0 %394
    %396 = vset.pattern.permute.xlu0 0
    %397 = vperm.xlu0 %396, %v356
    %v398 = vpop.permute.xlu0 %397
    %399 = vset.pattern.permute.xlu0 0
    %400 = vperm.xlu0 %399, %v357
    %v401 = vpop.permute.xlu0 %400
    %402 = vset.pattern.permute.xlu0 0
    %403 = vperm.xlu0 %402, %v358
    %v404 = vpop.permute.xlu0 %403
    %405 = vset.pattern.permute.xlu0 0
    %406 = vperm.xlu0 %405, %v359
    %v407 = vpop.permute.xlu0 %406
    %408 = vset.pattern.permute.xlu0 0
    %409 = vperm.xlu0 %408, %v360
    %v410 = vpop.permute.xlu0 %409
    %411 = vset.pattern.permute.xlu0 0
    %412 = vperm.xlu0 %411, %v361
    %v413 = vpop.permute.xlu0 %412
    %414 = vset.pattern.permute.xlu0 0
    %415 = vperm.xlu0 %414, %v362
    %v416 = vpop.permute.xlu0 %415
    %417 = vset.pattern.permute.xlu0 0
    %418 = vperm.xlu0 %417, %v363
    %v419 = vpop.permute.xlu0 %418
    %420 = vset.pattern.permute.xlu0 0
    %421 = vperm.xlu0 %420, %v364
    %v422 = vpop.permute.xlu0 %421
    %423 = vset.pattern.permute.xlu0 0
    %424 = vperm.xlu0 %423, %v365
    %v425 = vpop.permute.xlu0 %424
    %426 = vset.pattern.permute.xlu0 0
    %427 = vperm.xlu0 %426, %v366
    %v428 = vpop.permute.xlu0 %427
    %429 = vset.pattern.permute.xlu0 0
    %430 = vperm.xlu0 %429, %v367
    %v431 = vpop.permute.xlu0 %430
    %vm432 = vcmp.eq.s32.totalorder %v351, %v386
    %vm433 = vcmp.eq.s32.totalorder %v351, %v389
    %vm434 = vcmp.eq.s32.totalorder %v351, %v392
    %vm435 = vcmp.eq.s32.totalorder %v351, %v395
    %vm436 = vcmp.eq.s32.totalorder %v351, %v398
    %vm437 = vcmp.eq.s32.totalorder %v351, %v401
    %vm438 = vcmp.eq.s32.totalorder %v351, %v404
    %vm439 = vcmp.eq.s32.totalorder %v351, %v407
    %vm440 = vcmp.eq.s32.totalorder %v351, %v410
    %vm441 = vcmp.eq.s32.totalorder %v351, %v413
    %vm442 = vcmp.eq.s32.totalorder %v351, %v416
    %vm443 = vcmp.eq.s32.totalorder %v351, %v419
    %vm444 = vcmp.eq.s32.totalorder %v351, %v422
    %vm445 = vcmp.eq.s32.totalorder %v351, %v425
    %vm446 = vcmp.eq.s32.totalorder %v351, %v428
    %vm447 = vcmp.eq.s32.totalorder %v351, %v431
    %vm448 = vcmp.ne.f32.partialorder %v368, 0.0
    %vm449 = vcmp.ne.f32.partialorder %v369, 0.0
    %vm450 = vcmp.ne.f32.partialorder %v370, 0.0
    %vm451 = vcmp.ne.f32.partialorder %v371, 0.0
    %vm452 = vcmp.ne.f32.partialorder %v372, 0.0
    %vm453 = vcmp.ne.f32.partialorder %v373, 0.0
    %vm454 = vcmp.ne.f32.partialorder %v374, 0.0
    %vm455 = vcmp.ne.f32.partialorder %v375, 0.0
    %vm456 = vcmp.ne.f32.partialorder %v376, 0.0
    %vm457 = vcmp.ne.f32.partialorder %v377, 0.0
    %vm458 = vcmp.ne.f32.partialorder %v378, 0.0
    %vm459 = vcmp.ne.f32.partialorder %v379, 0.0
    %vm460 = vcmp.ne.f32.partialorder %v380, 0.0
    %vm461 = vcmp.ne.f32.partialorder %v381, 0.0
    %vm462 = vcmp.ne.f32.partialorder %v382, 0.0
    %vm463 = vcmp.ne.f32.partialorder %v383, 0.0
    %v464 = vsel %vm448, 1, 0
    %v465 = vsel %vm449, 1, 0
    %v466 = vsel %vm450, 1, 0
    %v467 = vsel %vm451, 1, 0
    %v468 = vsel %vm452, 1, 0
    %v469 = vsel %vm453, 1, 0
    %v470 = vsel %vm454, 1, 0
    %v471 = vsel %vm455, 1, 0
    %v472 = vsel %vm456, 1, 0
    %v473 = vsel %vm457, 1, 0
    %v474 = vsel %vm458, 1, 0
    %v475 = vsel %vm459, 1, 0
    %v476 = vsel %vm460, 1, 0
    %v477 = vsel %vm461, 1, 0
    %v478 = vsel %vm462, 1, 0
    %v479 = vsel %vm463, 1, 0
    %480 = vset.pattern.permute.xlu0 1
    %481 = vperm.xlu0 %480, %v464
    %v482 = vpop.permute.xlu0 %481
    %483 = vset.pattern.permute.xlu0 1
    %484 = vperm.xlu0 %483, %v465
    %v485 = vpop.permute.xlu0 %484
    %486 = vset.pattern.permute.xlu0 1
    %487 = vperm.xlu0 %486, %v466
    %v488 = vpop.permute.xlu0 %487
    %489 = vset.pattern.permute.xlu0 1
    %490 = vperm.xlu0 %489, %v467
    %v491 = vpop.permute.xlu0 %490
    %492 = vset.pattern.permute.xlu0 1
    %493 = vperm.xlu0 %492, %v468
    %v494 = vpop.permute.xlu0 %493
    %495 = vset.pattern.permute.xlu0 1
    %496 = vperm.xlu0 %495, %v469
    %v497 = vpop.permute.xlu0 %496
    %498 = vset.pattern.permute.xlu0 1
    %499 = vperm.xlu0 %498, %v470
    %v500 = vpop.permute.xlu0 %499
    %501 = vset.pattern.permute.xlu0 1
    %502 = vperm.xlu0 %501, %v471
    %v503 = vpop.permute.xlu0 %502
    %504 = vset.pattern.permute.xlu0 1
    %505 = vperm.xlu0 %504, %v472
    %v506 = vpop.permute.xlu0 %505
    %507 = vset.pattern.permute.xlu0 1
    %508 = vperm.xlu0 %507, %v473
    %v509 = vpop.permute.xlu0 %508
    %510 = vset.pattern.permute.xlu0 1
    %511 = vperm.xlu0 %510, %v474
    %v512 = vpop.permute.xlu0 %511
    %513 = vset.pattern.permute.xlu0 1
    %514 = vperm.xlu0 %513, %v475
    %v515 = vpop.permute.xlu0 %514
    %516 = vset.pattern.permute.xlu0 1
    %517 = vperm.xlu0 %516, %v476
    %v518 = vpop.permute.xlu0 %517
    %519 = vset.pattern.permute.xlu0 1
    %520 = vperm.xlu0 %519, %v477
    %v521 = vpop.permute.xlu0 %520
    %522 = vset.pattern.permute.xlu0 1
    %523 = vperm.xlu0 %522, %v478
    %v524 = vpop.permute.xlu0 %523
    %525 = vset.pattern.permute.xlu0 1
    %526 = vperm.xlu0 %525, %v479
    %v527 = vpop.permute.xlu0 %526
    %vm528 = vcmp.eq.s32.totalorder %v482, 1
    %vm529 = vcmp.eq.s32.totalorder %v485, 1
    %vm530 = vcmp.eq.s32.totalorder %v488, 1
    %vm531 = vcmp.eq.s32.totalorder %v491, 1
    %vm532 = vcmp.eq.s32.totalorder %v494, 1
    %vm533 = vcmp.eq.s32.totalorder %v497, 1
    %vm534 = vcmp.eq.s32.totalorder %v500, 1
    %vm535 = vcmp.eq.s32.totalorder %v503, 1
    %vm536 = vcmp.eq.s32.totalorder %v506, 1
    %vm537 = vcmp.eq.s32.totalorder %v509, 1
    %vm538 = vcmp.eq.s32.totalorder %v512, 1
    %vm539 = vcmp.eq.s32.totalorder %v515, 1
    %vm540 = vcmp.eq.s32.totalorder %v518, 1
    %vm541 = vcmp.eq.s32.totalorder %v521, 1
    %vm542 = vcmp.eq.s32.totalorder %v524, 1
    %vm543 = vcmp.eq.s32.totalorder %v527, 1
    %vm544 = vmand %vm432, %vm528
    %vm545 = vmand %vm433, %vm529
    %vm546 = vmand %vm434, %vm530
    %vm547 = vmand %vm435, %vm531
    %vm548 = vmand %vm436, %vm532
    %vm549 = vmand %vm437, %vm533
    %vm550 = vmand %vm438, %vm534
    %vm551 = vmand %vm439, %vm535
    %vm552 = vmand %vm440, %vm536
    %vm553 = vmand %vm441, %vm537
    %vm554 = vmand %vm442, %vm538
    %vm555 = vmand %vm443, %vm539
    %vm556 = vmand %vm444, %vm540
    %vm557 = vmand %vm445, %vm541
    %vm558 = vmand %vm446, %vm542
    %vm559 = vmand %vm447, %vm543
    %v560 = vsel %vm544, 1.0, 0.0
    %v561 = vsel %vm545, 1.0, 0.0
    %v562 = vsel %vm546, 1.0, 0.0
    %v563 = vsel %vm547, 1.0, 0.0
    %v564 = vsel %vm548, 1.0, 0.0
    %v565 = vsel %vm549, 1.0, 0.0
    %v566 = vsel %vm550, 1.0, 0.0
    %v567 = vsel %vm551, 1.0, 0.0
    %v568 = vsel %vm552, 1.0, 0.0
    %v569 = vsel %vm553, 1.0, 0.0
    %v570 = vsel %vm554, 1.0, 0.0
    %v571 = vsel %vm555, 1.0, 0.0
    %v572 = vsel %vm556, 1.0, 0.0
    %v573 = vsel %vm557, 1.0, 0.0
    %v574 = vsel %vm558, 1.0, 0.0
    %v575 = vsel %vm559, 1.0, 0.0
    %v576 = vadd.f32 %v368, 1.0
    %v577 = vadd.f32 %v369, 1.0
    %v578 = vadd.f32 %v370, 1.0
    %v579 = vadd.f32 %v371, 1.0
    %v580 = vadd.f32 %v372, 1.0
    %v581 = vadd.f32 %v373, 1.0
    %v582 = vadd.f32 %v374, 1.0
    %v583 = vadd.f32 %v375, 1.0
    %v584 = vadd.f32 %v376, 1.0
    %v585 = vadd.f32 %v377, 1.0
    %v586 = vadd.f32 %v378, 1.0
    %v587 = vadd.f32 %v379, 1.0
    %v588 = vadd.f32 %v380, 1.0
    %v589 = vadd.f32 %v381, 1.0
    %v590 = vadd.f32 %v382, 1.0
    %v591 = vadd.f32 %v383, 1.0
    %v592 = vmul.f32 %v576, 0.5
    %v593 = vmul.f32 %v577, 0.5
    %v594 = vmul.f32 %v578, 0.5
    %v595 = vmul.f32 %v579, 0.5
    %v596 = vmul.f32 %v580, 0.5
    %v597 = vmul.f32 %v581, 0.5
    %v598 = vmul.f32 %v582, 0.5
    %v599 = vmul.f32 %v583, 0.5
    %v600 = vmul.f32 %v584, 0.5
    %v601 = vmul.f32 %v585, 0.5
    %v602 = vmul.f32 %v586, 0.5
    %v603 = vmul.f32 %v587, 0.5
    %v604 = vmul.f32 %v588, 0.5
    %v605 = vmul.f32 %v589, 0.5
    %v606 = vmul.f32 %v590, 0.5
    %v607 = vmul.f32 %v591, 0.5
    %v608 = vmax.f32 %v276, 0.0
    %v609 = vmax.f32 %v278, 0.0
    %v610 = vmax.f32 %v281, 0.0
    %v611 = vmax.f32 %v283, 0.0
    %v612 = vmax.f32 %v286, 0.0
    %v613 = vmax.f32 %v288, 0.0
    %v614 = vmax.f32 %v291, 0.0
    %v615 = vmax.f32 %v293, 0.0
    %v616 = vmax.f32 %v296, 0.0
    %v617 = vmax.f32 %v298, 0.0
    %v618 = vmax.f32 %v301, 0.0
    %v619 = vmax.f32 %v303, 0.0
    %v620 = vmax.f32 %v306, 0.0
    %v621 = vmax.f32 %v308, 0.0
    %v622 = vmax.f32 %v311, 0.0
    %v623 = vmax.f32 %v313, 0.0
    %625 = vset.pattern.permute.xlu0 1
    %626 = vperm.xlu0 %625, %v592
    %v627 = vpop.permute.xlu0 %626
    %630 = vset.pattern.permute.xlu0 1
    %631 = vperm.xlu0 %630, %v593
    %v632 = vpop.permute.xlu0 %631
    %635 = vset.pattern.permute.xlu0 1
    %636 = vperm.xlu0 %635, %v594
    %v637 = vpop.permute.xlu0 %636
    %640 = vset.pattern.permute.xlu0 1
    %641 = vperm.xlu0 %640, %v595
    %v642 = vpop.permute.xlu0 %641
    %645 = vset.pattern.permute.xlu0 1
    %646 = vperm.xlu0 %645, %v596
    %v647 = vpop.permute.xlu0 %646
    %650 = vset.pattern.permute.xlu0 1
    %651 = vperm.xlu0 %650, %v597
    %v652 = vpop.permute.xlu0 %651
    %655 = vset.pattern.permute.xlu0 1
    %656 = vperm.xlu0 %655, %v598
    %v657 = vpop.permute.xlu0 %656
    %660 = vset.pattern.permute.xlu0 1
    %661 = vperm.xlu0 %660, %v599
    %v662 = vpop.permute.xlu0 %661
    %665 = vset.pattern.permute.xlu0 1
    %666 = vperm.xlu0 %665, %v600
    %v667 = vpop.permute.xlu0 %666
    %670 = vset.pattern.permute.xlu0 1
    %671 = vperm.xlu0 %670, %v601
    %v672 = vpop.permute.xlu0 %671
    %675 = vset.pattern.permute.xlu0 1
    %676 = vperm.xlu0 %675, %v602
    %v677 = vpop.permute.xlu0 %676
    %680 = vset.pattern.permute.xlu0 1
    %681 = vperm.xlu0 %680, %v603
    %v682 = vpop.permute.xlu0 %681
    %685 = vset.pattern.permute.xlu0 1
    %686 = vperm.xlu0 %685, %v604
    %v687 = vpop.permute.xlu0 %686
    %690 = vset.pattern.permute.xlu0 1
    %691 = vperm.xlu0 %690, %v605
    %v692 = vpop.permute.xlu0 %691
    %695 = vset.pattern.permute.xlu0 1
    %696 = vperm.xlu0 %695, %v606
    %v697 = vpop.permute.xlu0 %696
    %700 = vset.pattern.permute.xlu0 1
    %701 = vperm.xlu0 %700, %v607
    %v702 = vpop.permute.xlu0 %701
    %v704 = vmul.f32 %v276, %v627
    %v705 = vmul.f32 %v278, %v632
    %v706 = vmul.f32 %v281, %v637
    %v707 = vmul.f32 %v283, %v642
    %v708 = vmul.f32 %v286, %v647
    %v709 = vmul.f32 %v288, %v652
    %v710 = vmul.f32 %v291, %v657
    %v711 = vmul.f32 %v293, %v662
    %v712 = vmul.f32 %v296, %v667
    %v713 = vmul.f32 %v298, %v672
    %v714 = vmul.f32 %v301, %v677
    %v715 = vmul.f32 %v303, %v682
    %v716 = vmul.f32 %v306, %v687
    %v717 = vmul.f32 %v308, %v692
    %v718 = vmul.f32 %v311, %v697
    %v719 = vmul.f32 %v313, %v702
    %v720 = vsub.f32 %v608, %v704
    %v721 = vsub.f32 %v609, %v705
    %v722 = vsub.f32 %v610, %v706
    %v723 = vsub.f32 %v611, %v707
    %v724 = vsub.f32 %v612, %v708
    %v725 = vsub.f32 %v613, %v709
    %v726 = vsub.f32 %v614, %v710
    %v727 = vsub.f32 %v615, %v711
    %v728 = vsub.f32 %v616, %v712
    %v729 = vsub.f32 %v617, %v713
    %v730 = vsub.f32 %v618, %v714
    %v731 = vsub.f32 %v619, %v715
    %v732 = vsub.f32 %v620, %v716
    %v733 = vsub.f32 %v621, %v717
    %v734 = vsub.f32 %v622, %v718
    %v735 = vsub.f32 %v623, %v719
    %v736 = vand.u32 2147483647, %v276
    %v737 = vand.u32 2147483647, %v278
    %v738 = vand.u32 2147483647, %v281
    %v739 = vand.u32 2147483647, %v283
    %v740 = vand.u32 2147483647, %v286
    %v741 = vand.u32 2147483647, %v288
    %v742 = vand.u32 2147483647, %v291
    %v743 = vand.u32 2147483647, %v293
    %v744 = vand.u32 2147483647, %v296
    %v745 = vand.u32 2147483647, %v298
    %v746 = vand.u32 2147483647, %v301
    %v747 = vand.u32 2147483647, %v303
    %v748 = vand.u32 2147483647, %v306
    %v749 = vand.u32 2147483647, %v308
    %v750 = vand.u32 2147483647, %v311
    %v751 = vand.u32 2147483647, %v313
    %v752 = vsub.f32 0.0, %v736
    %v753 = vsub.f32 0.0, %v737
    %v754 = vsub.f32 0.0, %v738
    %v755 = vsub.f32 0.0, %v739
    %v756 = vsub.f32 0.0, %v740
    %v757 = vsub.f32 0.0, %v741
    %v758 = vsub.f32 0.0, %v742
    %v759 = vsub.f32 0.0, %v743
    %v760 = vsub.f32 0.0, %v744
    %v761 = vsub.f32 0.0, %v745
    %v762 = vsub.f32 0.0, %v746
    %v763 = vsub.f32 0.0, %v747
    %v764 = vsub.f32 0.0, %v748
    %v765 = vsub.f32 0.0, %v749
    %v766 = vsub.f32 0.0, %v750
    %v767 = vsub.f32 0.0, %v751
    %v768 = vmul.f32 %v752, 1.442695
    %v769 = vpow.pop %v768
    %v770 = vmul.f32 %v753, 1.442695
    %v771 = vpow.pop %v770
    %v772 = vmul.f32 %v754, 1.442695
    %v773 = vpow.pop %v772
    %v774 = vmul.f32 %v755, 1.442695
    %v775 = vpow.pop %v774
    %v776 = vmul.f32 %v756, 1.442695
    %v777 = vpow.pop %v776
    %v778 = vmul.f32 %v757, 1.442695
    %v779 = vpow.pop %v778
    %v780 = vmul.f32 %v758, 1.442695
    %v781 = vpow.pop %v780
    %v782 = vmul.f32 %v759, 1.442695
    %v783 = vpow.pop %v782
    %v784 = vmul.f32 %v760, 1.442695
    %v785 = vpow.pop %v784
    %v786 = vmul.f32 %v761, 1.442695
    %v787 = vpow.pop %v786
    %v788 = vmul.f32 %v762, 1.442695
    %v789 = vpow.pop %v788
    %v790 = vmul.f32 %v763, 1.442695
    %v791 = vpow.pop %v790
    %v792 = vmul.f32 %v764, 1.442695
    %v793 = vpow.pop %v792
    %v794 = vmul.f32 %v765, 1.442695
    %v795 = vpow.pop %v794
    %v796 = vmul.f32 %v766, 1.442695
    %v797 = vpow.pop %v796
    %v798 = vmul.f32 %v767, 1.442695
    %v799 = vpow.pop %v798
    %v800 = vadd.f32 %v769, 1.0
    %v801 = vlog2.pop %v800
    %v802 = vmul.f32 %v801, 0.6931472
    %v803 = vmul.f32 -0.5, %v769
    %v804 = vadd.f32 %v803, 1.0
    %v805 = vmul.f32 %v804, %v769
    %v806 = vand.u32 2147483647, %v769
    %vm807 = vcmp.lt.f32.partialorder %v806, 0.0004427343
    %v808 = vsel %vm807, %v805, %v802
    %v809 = vadd.f32 %v771, 1.0
    %v810 = vlog2.pop %v809
    %v811 = vmul.f32 %v810, 0.6931472
    %v812 = vmul.f32 -0.5, %v771
    %v813 = vadd.f32 %v812, 1.0
    %v814 = vmul.f32 %v813, %v771
    %v815 = vand.u32 2147483647, %v771
    %vm816 = vcmp.lt.f32.partialorder %v815, 0.0004427343
    %v817 = vsel %vm816, %v814, %v811
    %v818 = vadd.f32 %v773, 1.0
    %v819 = vlog2.pop %v818
    %v820 = vmul.f32 %v819, 0.6931472
    %v821 = vmul.f32 -0.5, %v773
    %v822 = vadd.f32 %v821, 1.0
    %v823 = vmul.f32 %v822, %v773
    %v824 = vand.u32 2147483647, %v773
    %vm825 = vcmp.lt.f32.partialorder %v824, 0.0004427343
    %v826 = vsel %vm825, %v823, %v820
    %v827 = vadd.f32 %v775, 1.0
    %v828 = vlog2.pop %v827
    %v829 = vmul.f32 %v828, 0.6931472
    %v830 = vmul.f32 -0.5, %v775
    %v831 = vadd.f32 %v830, 1.0
    %v832 = vmul.f32 %v831, %v775
    %v833 = vand.u32 2147483647, %v775
    %vm834 = vcmp.lt.f32.partialorder %v833, 0.0004427343
    %v835 = vsel %vm834, %v832, %v829
    %v836 = vadd.f32 %v777, 1.0
    %v837 = vlog2.pop %v836
    %v838 = vmul.f32 %v837, 0.6931472
    %v839 = vmul.f32 -0.5, %v777
    %v840 = vadd.f32 %v839, 1.0
    %v841 = vmul.f32 %v840, %v777
    %v842 = vand.u32 2147483647, %v777
    %vm843 = vcmp.lt.f32.partialorder %v842, 0.0004427343
    %v844 = vsel %vm843, %v841, %v838
    %v845 = vadd.f32 %v779, 1.0
    %v846 = vlog2.pop %v845
    %v847 = vmul.f32 %v846, 0.6931472
    %v848 = vmul.f32 -0.5, %v779
    %v849 = vadd.f32 %v848, 1.0
    %v850 = vmul.f32 %v849, %v779
    %v851 = vand.u32 2147483647, %v779
    %vm852 = vcmp.lt.f32.partialorder %v851, 0.0004427343
    %v853 = vsel %vm852, %v850, %v847
    %v854 = vadd.f32 %v781, 1.0
    %v855 = vlog2.pop %v854
    %v856 = vmul.f32 %v855, 0.6931472
    %v857 = vmul.f32 -0.5, %v781
    %v858 = vadd.f32 %v857, 1.0
    %v859 = vmul.f32 %v858, %v781
    %v860 = vand.u32 2147483647, %v781
    %vm861 = vcmp.lt.f32.partialorder %v860, 0.0004427343
    %v862 = vsel %vm861, %v859, %v856
    %v863 = vadd.f32 %v783, 1.0
    %v864 = vlog2.pop %v863
    %v865 = vmul.f32 %v864, 0.6931472
    %v866 = vmul.f32 -0.5, %v783
    %v867 = vadd.f32 %v866, 1.0
    %v868 = vmul.f32 %v867, %v783
    %v869 = vand.u32 2147483647, %v783
    %vm870 = vcmp.lt.f32.partialorder %v869, 0.0004427343
    %v871 = vsel %vm870, %v868, %v865
    %v872 = vadd.f32 %v785, 1.0
    %v873 = vlog2.pop %v872
    %v874 = vmul.f32 %v873, 0.6931472
    %v875 = vmul.f32 -0.5, %v785
    %v876 = vadd.f32 %v875, 1.0
    %v877 = vmul.f32 %v876, %v785
    %v878 = vand.u32 2147483647, %v785
    %vm879 = vcmp.lt.f32.partialorder %v878, 0.0004427343
    %v880 = vsel %vm879, %v877, %v874
    %v881 = vadd.f32 %v787, 1.0
    %v882 = vlog2.pop %v881
    %v883 = vmul.f32 %v882, 0.6931472
    %v884 = vmul.f32 -0.5, %v787
    %v885 = vadd.f32 %v884, 1.0
    %v886 = vmul.f32 %v885, %v787
    %v887 = vand.u32 2147483647, %v787
    %vm888 = vcmp.lt.f32.partialorder %v887, 0.0004427343
    %v889 = vsel %vm888, %v886, %v883
    %v890 = vadd.f32 %v789, 1.0
    %v891 = vlog2.pop %v890
    %v892 = vmul.f32 %v891, 0.6931472
    %v893 = vmul.f32 -0.5, %v789
    %v894 = vadd.f32 %v893, 1.0
    %v895 = vmul.f32 %v894, %v789
    %v896 = vand.u32 2147483647, %v789
    %vm897 = vcmp.lt.f32.partialorder %v896, 0.0004427343
    %v898 = vsel %vm897, %v895, %v892
    %v899 = vadd.f32 %v791, 1.0
    %v900 = vlog2.pop %v899
    %v901 = vmul.f32 %v900, 0.6931472
    %v902 = vmul.f32 -0.5, %v791
    %v903 = vadd.f32 %v902, 1.0
    %v904 = vmul.f32 %v903, %v791
    %v905 = vand.u32 2147483647, %v791
    %vm906 = vcmp.lt.f32.partialorder %v905, 0.0004427343
    %v907 = vsel %vm906, %v904, %v901
    %v908 = vadd.f32 %v793, 1.0
    %v909 = vlog2.pop %v908
    %v910 = vmul.f32 %v909, 0.6931472
    %v911 = vmul.f32 -0.5, %v793
    %v912 = vadd.f32 %v911, 1.0
    %v913 = vmul.f32 %v912, %v793
    %v914 = vand.u32 2147483647, %v793
    %vm915 = vcmp.lt.f32.partialorder %v914, 0.0004427343
    %v916 = vsel %vm915, %v913, %v910
    %v917 = vadd.f32 %v795, 1.0
    %v918 = vlog2.pop %v917
    %v919 = vmul.f32 %v918, 0.6931472
    %v920 = vmul.f32 -0.5, %v795
    %v921 = vadd.f32 %v920, 1.0
    %v922 = vmul.f32 %v921, %v795
    %v923 = vand.u32 2147483647, %v795
    %vm924 = vcmp.lt.f32.partialorder %v923, 0.0004427343
    %v925 = vsel %vm924, %v922, %v919
    %v926 = vadd.f32 %v797, 1.0
    %v927 = vlog2.pop %v926
    %v928 = vmul.f32 %v927, 0.6931472
    %v929 = vmul.f32 -0.5, %v797
    %v930 = vadd.f32 %v929, 1.0
    %v931 = vmul.f32 %v930, %v797
    %v932 = vand.u32 2147483647, %v797
    %vm933 = vcmp.lt.f32.partialorder %v932, 0.0004427343
    %v934 = vsel %vm933, %v931, %v928
    %v935 = vadd.f32 %v799, 1.0
    %v936 = vlog2.pop %v935
    %v937 = vmul.f32 %v936, 0.6931472
    %v938 = vmul.f32 -0.5, %v799
    %v939 = vadd.f32 %v938, 1.0
    %v940 = vmul.f32 %v939, %v799
    %v941 = vand.u32 2147483647, %v799
    %vm942 = vcmp.lt.f32.partialorder %v941, 0.0004427343
    %v943 = vsel %vm942, %v940, %v937
    %v944 = vadd.f32 %v720, %v808
    %v945 = vadd.f32 %v721, %v817
    %v946 = vadd.f32 %v722, %v826
    %v947 = vadd.f32 %v723, %v835
    %v948 = vadd.f32 %v724, %v844
    %v949 = vadd.f32 %v725, %v853
    %v950 = vadd.f32 %v726, %v862
    %v951 = vadd.f32 %v727, %v871
    %v952 = vadd.f32 %v728, %v880
    %v953 = vadd.f32 %v729, %v889
    %v954 = vadd.f32 %v730, %v898
    %v955 = vadd.f32 %v731, %v907
    %v956 = vadd.f32 %v732, %v916
    %v957 = vadd.f32 %v733, %v925
    %v958 = vadd.f32 %v734, %v934
    %v959 = vadd.f32 %v735, %v943
    %v960 = vmul.f32 %v944, %v560
    %v961 = vmul.f32 %v945, %v561
    %v962 = vmul.f32 %v946, %v562
    %v963 = vmul.f32 %v947, %v563
    %v964 = vmul.f32 %v948, %v564
    %v965 = vmul.f32 %v949, %v565
    %v966 = vmul.f32 %v950, %v566
    %v967 = vmul.f32 %v951, %v567
    %v968 = vmul.f32 %v952, %v568
    %v969 = vmul.f32 %v953, %v569
    %v970 = vmul.f32 %v954, %v570
    %v971 = vmul.f32 %v955, %v571
    %v972 = vmul.f32 %v956, %v572
    %v973 = vmul.f32 %v957, %v573
    %v974 = vmul.f32 %v958, %v574
    %v975 = vmul.f32 %v959, %v575
    %v976 = vadd.f32 %v960, %v961
    %v977 = vadd.f32 %v976, %v962
    %v978 = vadd.f32 %v977, %v963
    %v979 = vadd.f32 %v978, %v964
    %v980 = vadd.f32 %v979, %v965
    %v981 = vadd.f32 %v980, %v966
    %v982 = vadd.f32 %v981, %v967
    %v983 = vadd.f32 %v982, %v968
    %v984 = vadd.f32 %v983, %v969
    %v985 = vadd.f32 %v984, %v970
    %v986 = vadd.f32 %v985, %v971
    %v987 = vadd.f32 %v986, %v972
    %v988 = vadd.f32 %v987, %v973
    %v989 = vadd.f32 %v988, %v974
    %v990 = vadd.f32 %v989, %v975
    %991 = vst [vmem:[#allocation6] sm:$0xff] %v990
    %v992 = vadd.f32 %v560, %v561
    %v993 = vadd.f32 %v992, %v562
    %v994 = vadd.f32 %v993, %v563
    %v995 = vadd.f32 %v994, %v564
    %v996 = vadd.f32 %v995, %v565
    %v997 = vadd.f32 %v996, %v566
    %v998 = vadd.f32 %v997, %v567
    %v999 = vadd.f32 %v998, %v568
    %v1000 = vadd.f32 %v999, %v569
    %v1001 = vadd.f32 %v1000, %v570
    %v1002 = vadd.f32 %v1001, %v571
    %v1003 = vadd.f32 %v1002, %v572
    %v1004 = vadd.f32 %v1003, %v573
    %v1005 = vadd.f32 %v1004, %v574
    %v1006 = vadd.f32 %v1005, %v575
    %1007 = vst [vmem:[#allocation6 + $0x8] sm:$0xff] %v1006
    // Predicated region
    $region22: #{tpu_custom_call.1} parent=1 // pred_check
      _
    $region23: #{tpu_custom_call.1} parent=1 // pred_check_branch
      %1009 = sbr.rel (0) target = $region25
    $region24: #{tpu_custom_call.1} parent=1 // pred_region
      %1011 = vsyncadd [#allocation4], 0
      %s1012 = sshll.u32 [#allocation5], 4
      %s1013 = int_to_ptr.vmem [resolvable:$true] %s1012
      %s1014 = sshll.u32 %s4, 4
      %s1015 = int_to_ptr.hbm [resolvable:$true] %s1014
      %1020 = dma.vmem_to_hbm [thread:$0]  %s1013, 1024, %s1015, [#allocation4], 64, 64, 4
    $region25: #{tpu_custom_call.1} parent=1 // pred_fallthru
      _
    // Predicated region
    $region26: #{tpu_custom_call.1} parent=1 // pred_check
      _
    $region27: #{tpu_custom_call.1} parent=1 // pred_check_branch
      %1022 = sbr.rel (0) target = $region29
    $region28: #{tpu_custom_call.1} parent=1 // pred_region
      %1024 = vsyncadd [#allocation7], 0
      %s1025 = sshll.u32 [#allocation6], 4
      %s1026 = int_to_ptr.vmem [resolvable:$true] %s1025
      %s1027 = sshll.u32 %s5, 4
      %s1028 = int_to_ptr.hbm [resolvable:$true] %s1027
      %1033 = dma.vmem_to_hbm [thread:$0]  %s1026, 256, %s1028, [#allocation7], 128, 128, 8
    $region29: #{tpu_custom_call.1} parent=1 // pred_fallthru
      _
    // Predicated region
    $region30: #{tpu_custom_call.1} parent=1 // pred_check
      _
    $region31: #{tpu_custom_call.1} parent=1 // pred_check_branch
      %1035 = sbr.rel (0) target = $region33
    $region32: #{tpu_custom_call.1} parent=1 // pred_region
      %1037 = dma.done [#allocation4], 1024
    $region33: #{tpu_custom_call.1} parent=1 // pred_fallthru
      _
    // Predicated region
    $region34: #{tpu_custom_call.1} parent=1 // pred_check
      _
    $region35: #{tpu_custom_call.1} parent=1 // pred_check_branch
      %1039 = sbr.rel (0) target = $region37
    $region36: #{tpu_custom_call.1} parent=1 // pred_region
      %1041 = dma.done [#allocation7], 256
    $region37: #{tpu_custom_call.1} parent=1 // pred_fallthru
      _
    %1042 = vsyncpa [#allocation3], 1
    %1043 = vsyncpa [#allocation4], 1
    %1044 = vsyncpa [#allocation7], 1

</llo_original>
